<compile_context>
chip_gen: v5e
topology: v5e:2x2
jax: 0.10.0
libtpu: 0.0.40
codegen_flags: <defaults>
</compile_context>

<pallas_src>
import functools

import jax
import jax.numpy as jnp
from jax import lax
from jax.experimental import pallas as pl
from jax.experimental.pallas import tpu as pltpu

BN_EPS = 1e-5
NEG_SLOPE = 0.1
LANE = 128


def _round_up(x, m):
    return ((x + m - 1) // m) * m


# ---------- pass 1: conv tile (MXU, bf16 in / f32 acc) + per-tile sum & sumsq ----------
def conv_stats_kernel(p_ref, w_ref, stats_ref):
    tm = p_ref.shape[0]
    cpad = stats_ref.shape[2]
    y = jnp.dot(p_ref[...], w_ref[...], preferred_element_type=jnp.float32)  # [TM, Cpad]
    # Single-pass stats on the MXU via a ones-row matmul (keeps XLU/VALU free).
    ones = jnp.ones((1, tm), dtype=jnp.float32)
    ssum = jnp.dot(ones, y, preferred_element_type=jnp.float32)       # [1, Cpad]
    ssq = jnp.dot(ones, y * y, preferred_element_type=jnp.float32)    # [1, Cpad]
    stats_ref[0] = jnp.concatenate(
        [ssum, ssq, jnp.zeros((6, cpad), jnp.float32)], axis=0)


# ---------- pass 2: conv tile + folded-BN FMA + LeakyReLU (lane-dense output) ----------
def conv_bn_act_kernel(p_ref, w_ref, scale_ref, shift_ref, o_ref):
    y = jnp.dot(p_ref[...], w_ref[...], preferred_element_type=jnp.float32)  # [TM, Cpad]
    yn = y * scale_ref[...] + shift_ref[...]          # BN folded to one per-channel FMA
    o_ref[...] = jnp.where(yn >= 0, yn, NEG_SLOPE * yn)


def cnn_block_forward(x, weight, bias, gamma, beta, *, stride, padding, tile_m=256):
    del bias  # cancelled exactly by training-mode BN mean subtraction
    N, Cin, H, W = x.shape
    Cout, _, kh, kw = weight.shape
    Ho = (H + 2 * padding - kh) // stride + 1
    Wo = (W + 2 * padding - kw) // stride + 1
    M = N * Ho * Wo
    K = Cin * kh * kw
    Kpad = _round_up(K, LANE)
    Cpad = _round_up(Cout, LANE)
    TM = tile_m
    grid_m = -(-M // TM)
    Mpad = grid_m * TM

    # ---- glue: zero-pad + im2col (layout plumbing only; bf16 halves the bytes) ----
    # TODO(synk): for large Cin, fuse the unfold into the kernel (shifted-slice
    # accumulation over kh*kw on a VMEM-resident NHWC tile) instead of
    # materializing the kh*kw-times-larger patches matrix in HBM.
    xp = jnp.pad(x, ((0, 0), (0, 0), (padding, padding), (padding, padding)))
    cols = []
    for i in range(kh):
        for j in range(kw):
            cols.append(xp[:, :, i:i + stride * Ho:stride, j:j + stride * Wo:stride])
    patches = jnp.stack(cols, axis=0)                  # [kh*kw, N, Cin, Ho, Wo]
    patches = jnp.transpose(patches, (1, 3, 4, 2, 0))  # [N, Ho, Wo, Cin, kh*kw]
    patches = patches.reshape(M, K)
    # zero row-padding keeps the global sums exact; zero K/C padding is inert.
    patches = jnp.pad(patches, ((0, Mpad - M), (0, Kpad - K))).astype(jnp.bfloat16)

    wmat = weight.reshape(Cout, K).T                   # [K, Cout]
    wmat = jnp.pad(wmat, ((0, Kpad - K), (0, Cpad - Cout))).astype(jnp.bfloat16)

    # ---- pass 1: per-tile partial sums / sums-of-squares ----
    part = pl.pallas_call(
        conv_stats_kernel,
        out_shape=jax.ShapeDtypeStruct((grid_m, 8, Cpad), jnp.float32),
        grid_spec=pltpu.PrefetchScalarGridSpec(
            num_scalar_prefetch=0,
            grid=(grid_m,),
            in_specs=[
                pl.BlockSpec((TM, Kpad), lambda t: (t, 0)),
                pl.BlockSpec((Kpad, Cpad), lambda t: (0, 0)),
            ],
            out_specs=pl.BlockSpec((1, 8, Cpad), lambda t: (t, 0, 0)),
        ),
        compiler_params=pltpu.CompilerParams(dimension_semantics=("parallel",)),
    )(patches, wmat)

    # ---- tiny per-channel scalars: global BN stats -> folded scale/shift ----
    ssum = jnp.sum(part[:, 0, :Cout], axis=0)
    ssq = jnp.sum(part[:, 1, :Cout], axis=0)
    mean = ssum / M
    var = jnp.maximum(ssq / M - mean * mean, 0.0)      # biased (training-mode) variance
    scale = gamma * lax.rsqrt(var + BN_EPS)
    shift = beta - mean * scale
    scale_p = jnp.zeros((1, Cpad), jnp.float32).at[0, :Cout].set(scale)
    shift_p = jnp.zeros((1, Cpad), jnp.float32).at[0, :Cout].set(shift)

    # ---- pass 2: conv + folded BN + LeakyReLU, lane-dense [TM, 128] output ----
    out_flat = pl.pallas_call(
        conv_bn_act_kernel,
        out_shape=jax.ShapeDtypeStruct((Mpad, Cpad), jnp.float32),
        grid_spec=pltpu.PrefetchScalarGridSpec(
            num_scalar_prefetch=0,
            grid=(grid_m,),
            in_specs=[
                pl.BlockSpec((TM, Kpad), lambda t: (t, 0)),
                pl.BlockSpec((Kpad, Cpad), lambda t: (0, 0)),
                pl.BlockSpec((1, Cpad), lambda t: (0, 0)),
                pl.BlockSpec((1, Cpad), lambda t: (0, 0)),
            ],
            out_specs=pl.BlockSpec((TM, Cpad), lambda t: (t, 0)),
        ),
        compiler_params=pltpu.CompilerParams(dimension_semantics=("parallel",)),
    )(patches, wmat, scale_p, shift_p)

    # back to NCHW to preserve the module's output layout
    out = out_flat[:M, :Cout].reshape(N, Ho, Wo, Cout)
    return jnp.transpose(out, (0, 3, 1, 2))


def reference_forward(x, weight, bias, gamma, beta, *, stride, padding,
                      matmul_dtype=jnp.float32):
    """Pure-JAX reference (conv + train-mode BN + leaky relu), NCHW."""
    y = lax.conv_general_dilated(
        x.astype(matmul_dtype), weight.astype(matmul_dtype),
        window_strides=(stride, stride),
        padding=[(padding, padding), (padding, padding)],
        dimension_numbers=("NCHW", "OIHW", "NCHW"),
        preferred_element_type=jnp.float32,
    ) + bias.reshape(1, -1, 1, 1)
    mean = jnp.mean(y, axis=(0, 2, 3), keepdims=True)
    var = jnp.mean(jnp.square(y - mean), axis=(0, 2, 3), keepdims=True)
    yn = (y - mean) * lax.rsqrt(var + BN_EPS)
    yn = yn * gamma.reshape(1, -1, 1, 1) + beta.reshape(1, -1, 1, 1)
    return jnp.where(yn >= 0, yn, NEG_SLOPE * yn)


if __name__ == "__main__":
    # Module config: CNNBlock(in_channels=4, out_channels=8, kernel_size=3,
    #                         stride=1, padding=1)
    in_channels, out_channels, kernel_size, stride, padding = 4, 8, 3, 1, 1
    N, H, W = 2, 16, 16

    key = jax.random.PRNGKey(0)
    kx, kw_, kb, kg, kbeta = jax.random.split(key, 5)

    x = jax.random.normal(kx, (N, in_channels, H, W), dtype=jnp.float32)
    weight = 0.1 * jax.random.normal(
        kw_, (out_channels, in_channels, kernel_size, kernel_size), dtype=jnp.float32)
    bias = 0.1 * jax.random.normal(kb, (out_channels,), dtype=jnp.float32)
    gamma = 1.0 + 0.1 * jax.random.normal(kg, (out_channels,), dtype=jnp.float32)
    beta = 0.1 * jax.random.normal(kbeta, (out_channels,), dtype=jnp.float32)

    fwd = jax.jit(functools.partial(cnn_block_forward, stride=stride, padding=padding))
    out = jax.block_until_ready(fwd(x, weight, bias, gamma, beta))
    assert out.shape == (N, out_channels, H, W), out.shape

    # Tight check vs a reference using the same bf16 operand precision as the MXU.
    ref_bf16 = reference_forward(x, weight, bias, gamma, beta,
                                 stride=stride, padding=padding,
                                 matmul_dtype=jnp.bfloat16)
    assert jnp.allclose(out, ref_bf16, atol=2e-3, rtol=2e-3), (
        float(jnp.max(jnp.abs(out - ref_bf16))))

    # Loose check vs the full-f32 PyTorch-equivalent reference (only difference is
    # the bf16 rounding of the MXU operands).
    ref_f32 = reference_forward(x, weight, bias, gamma, beta,
                                stride=stride, padding=padding)
    assert jnp.allclose(out, ref_f32, atol=5e-2, rtol=5e-2), (
        float(jnp.max(jnp.abs(out - ref_f32))))

    print("KERNEL_OK")
</pallas_src>

<mosaic_0001>
module attributes {stable_mosaic.version = 11 : i64} {
  func.func @conv_stats_kernel(%arg0: i32, %arg1: memref<256x128xbf16, #tpu.memory_space<vmem>>, %arg2: memref<128x128xbf16, #tpu.memory_space<vmem>>, %arg3: memref<1x8x128xf32, #tpu.memory_space<vmem>>) attributes {dimension_semantics = [#tpu.dimension_semantics<parallel>], iteration_bounds = array<i64: 2>, scalar_prefetch = 0 : i64, scratch_operands = 0 : i64, tpu.core_type = #tpu.core_type<tc>, window_params = [{transform_indices = @transform_0, window_bounds = array<i64: 256, 128>}, {pipeline_mode = #tpu.pipeline_mode<synchronous>, transform_indices = @transform_1, window_bounds = array<i64: 128, 128>}, {transform_indices = @transform_2, window_bounds = array<i64: 1, 8, 128>}]} {
    %c0 = arith.constant 0 : index
    %c0_0 = arith.constant 0 : index
    %0 = vector.load %arg1[%c0, %c0_0] : memref<256x128xbf16, #tpu.memory_space<vmem>>, vector<256x128xbf16>
    %c0_1 = arith.constant 0 : index
    %c0_2 = arith.constant 0 : index
    %1 = vector.load %arg2[%c0_1, %c0_2] : memref<128x128xbf16, #tpu.memory_space<vmem>>, vector<128x128xbf16>
    %cst = arith.constant dense<0.000000e+00> : vector<256x128xf32>
    %2 = tpu.matmul %0, %1, %cst {dimension_numbers = #tpu.dot_dimension_numbers<[1], [0], [0], [1], [0, 0, 1, 1], [], []>} : vector<256x128xbf16>, vector<128x128xbf16>, vector<256x128xf32> -> vector<256x128xf32>
    %cst_3 = arith.constant 1.000000e+00 : f32
    %3 = vector.broadcast %cst_3 : f32 to vector<1x256xf32>
    %cst_4 = arith.constant dense<0.000000e+00> : vector<1x128xf32>
    %4 = tpu.matmul %3, %2, %cst_4 {dimension_numbers = #tpu.dot_dimension_numbers<[1], [0], [0], [1], [0, 0, 1, 1], [], []>} : vector<1x256xf32>, vector<256x128xf32>, vector<1x128xf32> -> vector<1x128xf32>
    %5 = arith.mulf %2, %2 : vector<256x128xf32>
    %cst_5 = arith.constant dense<0.000000e+00> : vector<1x128xf32>
    %6 = tpu.matmul %3, %5, %cst_5 {dimension_numbers = #tpu.dot_dimension_numbers<[1], [0], [0], [1], [0, 0, 1, 1], [], []>} : vector<1x256xf32>, vector<256x128xf32>, vector<1x128xf32> -> vector<1x128xf32>
    %cst_6 = arith.constant 0.000000e+00 : f32
    %7 = vector.broadcast %cst_6 : f32 to vector<6x128xf32>
    %8 = tpu.concatenate %4, %6, %7 in 0 : vector<1x128xf32>, vector<1x128xf32>, vector<6x128xf32> -> vector<8x128xf32>
    %c0_7 = arith.constant 0 : index
    %c0_8 = arith.constant 0 : index
    %c0_9 = arith.constant 0 : index
    %9 = vector.load %arg3[%c0_7, %c0_8, %c0_9] : memref<1x8x128xf32, #tpu.memory_space<vmem>>, vector<1x8x128xf32>
    %10 = vector.shape_cast %9 : vector<1x8x128xf32> to vector<8x128xf32>
    %11 = vector.shape_cast %8 : vector<8x128xf32> to vector<1x8x128xf32>
    tpu.vector_store %arg3[%c0_7, %c0_8, %c0_9], %11 {strides = array<i32>} : memref<1x8x128xf32, #tpu.memory_space<vmem>>, vector<1x8x128xf32>,
    return
  }
  func.func @transform_0(%arg0: i32) -> (i32, i32) {
    %c0_i32 = arith.constant 0 : i32
    %c0_i32_0 = arith.constant 0 : i32
    return %arg0, %c0_i32 : i32, i32
  }
  func.func @transform_1(%arg0: i32) -> (i32, i32) {
    %c0_i32 = arith.constant 0 : i32
    %c0_i32_0 = arith.constant 0 : i32
    %c0_i32_1 = arith.constant 0 : i32
    return %c0_i32, %c0_i32_0 : i32, i32
  }
  func.func @transform_2(%arg0: i32) -> (i32, i32, i32) {
    %c0_i32 = arith.constant 0 : i32
    %c0_i32_0 = arith.constant 0 : i32
    %c0_i32_1 = arith.constant 0 : i32
    return %arg0, %c0_i32, %c0_i32_0 : i32, i32, i32
  }
}

module attributes {stable_mosaic.version = 11 : i64} {
  func.func @conv_bn_act_kernel(%arg0: i32, %arg1: memref<256x128xbf16, #tpu.memory_space<vmem>>, %arg2: memref<128x128xbf16, #tpu.memory_space<vmem>>, %arg3: memref<1x128xf32, #tpu.memory_space<vmem>>, %arg4: memref<1x128xf32, #tpu.memory_space<vmem>>, %arg5: memref<256x128xf32, #tpu.memory_space<vmem>>) attributes {dimension_semantics = [#tpu.dimension_semantics<parallel>], iteration_bounds = array<i64: 2>, scalar_prefetch = 0 : i64, scratch_operands = 0 : i64, tpu.core_type = #tpu.core_type<tc>, window_params = [{transform_indices = @transform_0, window_bounds = array<i64: 256, 128>}, {pipeline_mode = #tpu.pipeline_mode<synchronous>, transform_indices = @transform_1, window_bounds = array<i64: 128, 128>}, {pipeline_mode = #tpu.pipeline_mode<synchronous>, transform_indices = @transform_2, window_bounds = array<i64: 1, 128>}, {pipeline_mode = #tpu.pipeline_mode<synchronous>, transform_indices = @transform_3, window_bounds = array<i64: 1, 128>}, {transform_indices = @transform_4, window_bounds = array<i64: 256, 128>}]} {
    %c0 = arith.constant 0 : index
    %c0_0 = arith.constant 0 : index
    %0 = vector.load %arg1[%c0, %c0_0] : memref<256x128xbf16, #tpu.memory_space<vmem>>, vector<256x128xbf16>
    %c0_1 = arith.constant 0 : index
    %c0_2 = arith.constant 0 : index
    %1 = vector.load %arg2[%c0_1, %c0_2] : memref<128x128xbf16, #tpu.memory_space<vmem>>, vector<128x128xbf16>
    %cst = arith.constant dense<0.000000e+00> : vector<256x128xf32>
    %2 = tpu.matmul %0, %1, %cst {dimension_numbers = #tpu.dot_dimension_numbers<[1], [0], [0], [1], [0, 0, 1, 1], [], []>} : vector<256x128xbf16>, vector<128x128xbf16>, vector<256x128xf32> -> vector<256x128xf32>
    %c0_3 = arith.constant 0 : index
    %c0_4 = arith.constant 0 : index
    %3 = vector.load %arg3[%c0_3, %c0_4] : memref<1x128xf32, #tpu.memory_space<vmem>>, vector<1x128xf32>
    %4 = vector.broadcast %3 : vector<1x128xf32> to vector<256x128xf32>
    %5 = arith.mulf %2, %4 : vector<256x128xf32>
    %c0_5 = arith.constant 0 : index
    %c0_6 = arith.constant 0 : index
    %6 = vector.load %arg4[%c0_5, %c0_6] : memref<1x128xf32, #tpu.memory_space<vmem>>, vector<1x128xf32>
    %7 = vector.broadcast %6 : vector<1x128xf32> to vector<256x128xf32>
    %8 = arith.addf %5, %7 : vector<256x128xf32>
    %cst_7 = arith.constant 0.000000e+00 : f32
    %9 = vector.broadcast %cst_7 : f32 to vector<256x128xf32>
    %10 = arith.cmpf oge, %8, %9 : vector<256x128xf32>
    %cst_8 = arith.constant 1.000000e-01 : f32
    %11 = vector.broadcast %cst_8 : f32 to vector<256x128xf32>
    %12 = arith.mulf %11, %8 : vector<256x128xf32>
    %13 = arith.select %10, %8, %12 : vector<256x128xi1>, vector<256x128xf32>
    %c0_9 = arith.constant 0 : index
    %c0_10 = arith.constant 0 : index
    %14 = vector.load %arg5[%c0_9, %c0_10] : memref<256x128xf32, #tpu.memory_space<vmem>>, vector<256x128xf32>
    tpu.vector_store %arg5[%c0_9, %c0_10], %13 {strides = array<i32>} : memref<256x128xf32, #tpu.memory_space<vmem>>, vector<256x128xf32>,
    return
  }
  func.func @transform_0(%arg0: i32) -> (i32, i32) {
    %c0_i32 = arith.constant 0 : i32
    %c0_i32_0 = arith.constant 0 : i32
    return %arg0, %c0_i32 : i32, i32
  }
  func.func @transform_1(%arg0: i32) -> (i32, i32) {
    %c0_i32 = arith.constant 0 : i32
    %c0_i32_0 = arith.constant 0 : i32
    %c0_i32_1 = arith.constant 0 : i32
    return %c0_i32, %c0_i32_0 : i32, i32
  }
  func.func @transform_2(%arg0: i32) -> (i32, i32) {
    %c0_i32 = arith.constant 0 : i32
    %c0_i32_0 = arith.constant 0 : i32
    %c0_i32_1 = arith.constant 0 : i32
    return %c0_i32, %c0_i32_0 : i32, i32
  }
  func.func @transform_3(%arg0: i32) -> (i32, i32) {
    %c0_i32 = arith.constant 0 : i32
    %c0_i32_0 = arith.constant 0 : i32
    %c0_i32_1 = arith.constant 0 : i32
    return %c0_i32, %c0_i32_0 : i32, i32
  }
  func.func @transform_4(%arg0: i32) -> (i32, i32) {
    %c0_i32 = arith.constant 0 : i32
    %c0_i32_0 = arith.constant 0 : i32
    return %arg0, %c0_i32 : i32, i32
  }
}

</mosaic_0001>

<llo_original>
// kernel: cnn_block_forward.2
$region0: #{cnn_block_forward.2}
  #allocation0 [shape = 'u32[]', space=smem, size = 0x4, offset = 0x4, fixed_abs, tag = 'smem constant byte address 0x4 - core index']
  #allocation1 [shape = 'u32[72,128]{1,0:T(1,128)}', space=vmem, size = 0x9000, scoped, tag = 'internal scratch']
  %s0 = inlined_call_operand.vmem [shape: bf16[512,128], index: 0, kind: input, shape index: {}]
  %s1 = inlined_call_operand.vmem [shape: bf16[128,128], index: 1, kind: input, shape index: {}]
  %s2 = inlined_call_operand.vmem [shape: f32[2,8,128], index: 2, kind: output, shape index: {}]
  %s3 = sld [smem:[#allocation0]]
  $region41: #{cnn_block_forward.2} parent=0
    _
  %s5 = ssub.s32 1, %s3
  %s6 = scalar_select 0, %s5, %s3
  loop: start=0, step=1, limit=4
  $region2: #{cnn_block_forward.2} parent=0 // loop_pre_header
    _
  $region3: #{cnn_block_forward.2} parent=0 // loop_header
    %s8 = sphi 0, %s12
    %p9 = scmp.ge.s32.totalorder %s8, 4
    %s18 = sphi 0, %s20
    %s21 = sphi 0, %s18
    %s22 = sphi 0, %s21
    %s38 = sphi 0, %s22
    %s42 = sphi 0, %s42
    %s44 = sphi 0, %s42
    %s45 = sphi 0, %s44
    %s59 = sphi 0, %s45
    %s65 = sphi 0, %s67
    %s68 = sphi 0, %s65
    %s69 = sphi 0, %s68
    %s85 = sphi 0, %s69
  $region4: #{cnn_block_forward.2} parent=0 // loop_header_branch
    %11 = sbr.rel (%p9) target = $region8
  $region5: #{cnn_block_forward.2} parent=0 // loop_body
    %s13 = ssub.s32 %s8, 1
    %s14 = ssub.s32 %s8, 2
    %s15 = sadd.s32 %s8, 1
    %s16 = ssub.s32 %s8, %s15
    %p17 = scmp.eq.s32.totalorder %s16, 0
    %s19 = sadd.s32 %s18, 1
    %s20 = scalar_select %p17, %s18, %s19
    %p23 = pneg %p17
    %p24 = scmp.eq.s32.totalorder %s8, 1
    %p25 = por %p23, %p24
    %p26 = scmp.ne.s32.totalorder %s18, %s21
    %p27 = scmp.eq.s32.totalorder %s8, 0
    %p28 = por %p26, %p27
    %p29 = scmp.ne.s32.totalorder %s18, %s21
    %p30 = scmp.eq.s32.totalorder %s13, 1
    %p31 = por %p29, %p30
    %p32 = scmp.ne.s32.totalorder %s21, %s22
    %p33 = scmp.eq.s32.totalorder %s13, 0
    %p34 = por %p32, %p33
    %p35 = scmp.ne.s32.totalorder %s21, %s22
    %p36 = scmp.eq.s32.totalorder %s14, 1
    %p37 = por %p35, %p36
    %p39 = scmp.ne.s32.totalorder %s22, %s38
    %p40 = scmp.eq.s32.totalorder %s14, 0
    %p41 = por %p39, %p40
    %s43 = sadd.s32 %s42, 1
    %p46 = scmp.eq.s32.totalorder %s8, 1
    %p47 = scmp.ne.s32.totalorder %s42, %s44
    %p48 = scmp.eq.s32.totalorder %s8, 0
    %p49 = por %p47, %p48
    %p50 = scmp.ne.s32.totalorder %s42, %s44
    %p51 = scmp.eq.s32.totalorder %s13, 1
    %p52 = por %p50, %p51
    %p53 = scmp.ne.s32.totalorder %s44, %s45
    %p54 = scmp.eq.s32.totalorder %s13, 0
    %p55 = por %p53, %p54
    %p56 = scmp.ne.s32.totalorder %s44, %s45
    %p57 = scmp.eq.s32.totalorder %s14, 1
    %p58 = por %p56, %p57
    %p60 = scmp.ne.s32.totalorder %s45, %s59
    %p61 = scmp.eq.s32.totalorder %s14, 0
    %p62 = por %p60, %p61
    %s63 = ssub.s32 %s8, %s15
    %p64 = scmp.eq.s32.totalorder %s63, 0
    %s66 = sadd.s32 %s65, 1
    %s67 = scalar_select %p64, %s65, %s66
    %p70 = pneg %p64
    %p71 = scmp.eq.s32.totalorder %s8, 1
    %p72 = por %p70, %p71
    %p73 = scmp.ne.s32.totalorder %s65, %s68
    %p74 = scmp.eq.s32.totalorder %s8, 0
    %p75 = por %p73, %p74
    %p76 = scmp.ne.s32.totalorder %s65, %s68
    %p77 = scmp.eq.s32.totalorder %s13, 1
    %p78 = por %p76, %p77
    %p79 = scmp.ne.s32.totalorder %s68, %s69
    %p80 = scmp.eq.s32.totalorder %s13, 0
    %p81 = por %p79, %p80
    %p82 = scmp.ne.s32.totalorder %s68, %s69
    %p83 = scmp.eq.s32.totalorder %s14, 1
    %p84 = por %p82, %p83
    %p86 = scmp.ne.s32.totalorder %s69, %s85
    %p87 = scmp.eq.s32.totalorder %s14, 0
    %p88 = por %p86, %p87
    %p89 = scmp.le.s32.totalorder 1, %s8
    %p90 = scmp.lt.s32.totalorder %s8, 3
    %p91 = pnand %p89, %p90
    %p92 = pneg %p91
    // Predicated region
    $region9: #{cnn_block_forward.2} parent=5 // pred_check
      _
    $region10: #{cnn_block_forward.2} parent=5 // pred_check_branch
      %94 = sbr.rel (%p91) target = $region12
    $region11: #{cnn_block_forward.2} parent=5 // pred_region
      %s95 = ssub.s32 %s8, 1
      // Predicated region
      $region13: #{cnn_block_forward.2} parent=11 // pred_check
        %p96 = pneg %p55
      $region14: #{cnn_block_forward.2} parent=11 // pred_check_branch
        %98 = sbr.rel (%p96) target = $region16
      $region15: #{cnn_block_forward.2} parent=11 // pred_region
        _
      $region16: #{cnn_block_forward.2} parent=11 // pred_fallthru
        _
    $region12: #{cnn_block_forward.2} parent=5 // pred_fallthru
      _
    %p99 = scmp.lt.s32.totalorder %s8, 2
    // Predicated region
    $region17: #{cnn_block_forward.2} parent=5 // pred_check
      %p100 = pneg %p99
    $region18: #{cnn_block_forward.2} parent=5 // pred_check_branch
      %102 = sbr.rel (%p100) target = $region20
    $region19: #{cnn_block_forward.2} parent=5 // pred_region
      // Predicated region
      $region21: #{cnn_block_forward.2} parent=19 // pred_check
        %p103 = pneg %p28
      $region22: #{cnn_block_forward.2} parent=19 // pred_check_branch
        %105 = sbr.rel (%p103) target = $region24
      $region23: #{cnn_block_forward.2} parent=19 // pred_region
        %s106 = smul.u32 32, %s8
        %p107 = scmp.lt.s32.totalorder %s106, 63
        %s108 = scalar_select %p107, %s106, 63
        %s109 = smul.addr %s108, 4
        %s110 = scalar_lea.vmem %s0, %s109
        %s111 = smul.u32 32, %s8
      $region24: #{cnn_block_forward.2} parent=19 // pred_fallthru
        _
    $region20: #{cnn_block_forward.2} parent=5 // pred_fallthru
      _
    %p112 = scmp.le.s32.totalorder 1, %s8
    %p113 = scmp.lt.s32.totalorder %s8, 3
    %p114 = pnand %p112, %p113
    %p115 = pneg %p114
    // Predicated region
    $region25: #{cnn_block_forward.2} parent=5 // pred_check
      _
    $region26: #{cnn_block_forward.2} parent=5 // pred_check_branch
      %117 = sbr.rel (%p114) target = $region28
    $region27: #{cnn_block_forward.2} parent=5 // pred_region
      %s118 = ssub.s32 %s8, 1
      %s119 = smul.u32 32, %s13
      %p120 = scmp.lt.s32.totalorder %s119, 63
      %s121 = scalar_select %p120, %s119, 63
      %s122 = smul.addr %s121, 4
      %s123 = scalar_lea.vmem %s0, %s122
      %p124 = pneg %p34
      %p125 = pneg %p31
      %p126 = pneg %p55
      %p127 = pneg %p52
      %p128 = pneg %p81
      %p129 = pneg %p78
      %p130 = scmp.lt.s32.totalorder %s13, 1
      %s131 = scalar_select %p130, %s13, 1
      %s132 = smul.addr %s131, 8
      %s133 = scalar_lea.vmem %s2, %s132
      %s134 = smul.u32 32, %s13
      %p135 = scmp.lt.s32.totalorder %s134, 63
      %s136 = scalar_select %p135, %s134, 63
      %s137 = smul.addr %s136, 4
      %s138 = scalar_lea.vmem %s0, %s137
      %s139 = smul.u32 32, %s13
      %p140 = scmp.lt.s32.totalorder %s13, 1
      %s141 = scalar_select %p140, %s13, 1
      %s142 = smul.addr %s141, 8
      %s143 = scalar_lea.vmem %s2, %s142
      %v144 = vld [vmem:[%s138] sm:$0xf]
      %v145 = vld [vmem:[%s138 + $0x4] sm:$0xf]
      %v146 = vld [vmem:[%s138 + $0x8] sm:$0xf]
      %v147 = vld [vmem:[%s138 + $0xc] sm:$0xf]
      %v148 = vld [vmem:[%s138 + $0x10] sm:$0xf]
      %v149 = vld [vmem:[%s138 + $0x14] sm:$0xf]
      %v150 = vld [vmem:[%s138 + $0x18] sm:$0xf]
      %v151 = vld [vmem:[%s138 + $0x1c] sm:$0xf]
      %v152 = vld [vmem:[%s138 + $0x20] sm:$0xf]
      %v153 = vld [vmem:[%s138 + $0x24] sm:$0xf]
      %v154 = vld [vmem:[%s138 + $0x28] sm:$0xf]
      %v155 = vld [vmem:[%s138 + $0x2c] sm:$0xf]
      %v156 = vld [vmem:[%s138 + $0x30] sm:$0xf]
      %v157 = vld [vmem:[%s138 + $0x34] sm:$0xf]
      %v158 = vld [vmem:[%s138 + $0x38] sm:$0xf]
      %v159 = vld [vmem:[%s138 + $0x3c] sm:$0xf]
      %v160 = vld [vmem:[%s138 + $0x40] sm:$0xf]
      %v161 = vld [vmem:[%s138 + $0x44] sm:$0xf]
      %v162 = vld [vmem:[%s138 + $0x48] sm:$0xf]
      %v163 = vld [vmem:[%s138 + $0x4c] sm:$0xf]
      %v164 = vld [vmem:[%s138 + $0x50] sm:$0xf]
      %v165 = vld [vmem:[%s138 + $0x54] sm:$0xf]
      %v166 = vld [vmem:[%s138 + $0x58] sm:$0xf]
      %v167 = vld [vmem:[%s138 + $0x5c] sm:$0xf]
      %v168 = vld [vmem:[%s138 + $0x60] sm:$0xf]
      %v169 = vld [vmem:[%s138 + $0x64] sm:$0xf]
      %v170 = vld [vmem:[%s138 + $0x68] sm:$0xf]
      %v171 = vld [vmem:[%s138 + $0x6c] sm:$0xf]
      %v172 = vld [vmem:[%s138 + $0x70] sm:$0xf]
      %v173 = vld [vmem:[%s138 + $0x74] sm:$0xf]
      %v174 = vld [vmem:[%s138 + $0x78] sm:$0xf]
      %v175 = vld [vmem:[%s138 + $0x7c] sm:$0xf]
      %v176 = vld [vmem:[%s1] sm:$0xf]
      %v177 = vld [vmem:[%s1 + $0x4] sm:$0xf]
      %v178 = vld [vmem:[%s1 + $0x8] sm:$0xf]
      %v179 = vld [vmem:[%s1 + $0xc] sm:$0xf]
      %v180 = vld [vmem:[%s1 + $0x10] sm:$0xf]
      %v181 = vld [vmem:[%s1 + $0x14] sm:$0xf]
      %v182 = vld [vmem:[%s1 + $0x18] sm:$0xf]
      %v183 = vld [vmem:[%s1 + $0x1c] sm:$0xf]
      %v184 = vld [vmem:[%s1 + $0x20] sm:$0xf]
      %v185 = vld [vmem:[%s1 + $0x24] sm:$0xf]
      %v186 = vld [vmem:[%s1 + $0x28] sm:$0xf]
      %v187 = vld [vmem:[%s1 + $0x2c] sm:$0xf]
      %v188 = vld [vmem:[%s1 + $0x30] sm:$0xf]
      %v189 = vld [vmem:[%s1 + $0x34] sm:$0xf]
      %v190 = vld [vmem:[%s1 + $0x38] sm:$0xf]
      %v191 = vld [vmem:[%s1 + $0x3c] sm:$0xf]
      %v224 = vunpack.c.l.b16 %v144
      %v225 = vunpack.c.l.b16 %v145
      %v226 = vunpack.c.l.b16 %v146
      %v227 = vunpack.c.l.b16 %v147
      %v228 = vunpack.c.l.b16 %v148
      %v229 = vunpack.c.l.b16 %v149
      %v230 = vunpack.c.l.b16 %v150
      %v231 = vunpack.c.l.b16 %v151
      %v232 = vunpack.c.l.b16 %v152
      %v233 = vunpack.c.l.b16 %v153
      %v234 = vunpack.c.l.b16 %v154
      %v235 = vunpack.c.l.b16 %v155
      %v236 = vunpack.c.l.b16 %v156
      %v237 = vunpack.c.l.b16 %v157
      %v238 = vunpack.c.l.b16 %v158
      %v239 = vunpack.c.l.b16 %v159
      %v240 = vunpack.c.l.b16 %v160
      %v241 = vunpack.c.l.b16 %v161
      %v242 = vunpack.c.l.b16 %v162
      %v243 = vunpack.c.l.b16 %v163
      %v244 = vunpack.c.l.b16 %v164
      %v245 = vunpack.c.l.b16 %v165
      %v246 = vunpack.c.l.b16 %v166
      %v247 = vunpack.c.l.b16 %v167
      %v248 = vunpack.c.l.b16 %v168
      %v249 = vunpack.c.l.b16 %v169
      %v250 = vunpack.c.l.b16 %v170
      %v251 = vunpack.c.l.b16 %v171
      %v252 = vunpack.c.l.b16 %v172
      %v253 = vunpack.c.l.b16 %v173
      %v254 = vunpack.c.l.b16 %v174
      %v255 = vunpack.c.l.b16 %v175
      %v256 = vpack.c.b16 %v225, %v224
      %v257 = vpack.c.b16 %v227, %v226
      %v258 = vpack.c.b16 %v229, %v228
      %v259 = vpack.c.b16 %v231, %v230
      %v260 = vpack.c.b16 %v233, %v232
      %v261 = vpack.c.b16 %v235, %v234
      %v262 = vpack.c.b16 %v237, %v236
      %v263 = vpack.c.b16 %v239, %v238
      %v264 = vpack.c.b16 %v241, %v240
      %v265 = vpack.c.b16 %v243, %v242
      %v266 = vpack.c.b16 %v245, %v244
      %v267 = vpack.c.b16 %v247, %v246
      %v268 = vpack.c.b16 %v249, %v248
      %v269 = vpack.c.b16 %v251, %v250
      %v270 = vpack.c.b16 %v253, %v252
      %v271 = vpack.c.b16 %v255, %v254
      %v304 = vunpack.c.l.b16 %v176
      %v305 = vunpack.c.l.b16 %v177
      %v306 = vunpack.c.l.b16 %v178
      %v307 = vunpack.c.l.b16 %v179
      %v308 = vunpack.c.l.b16 %v180
      %v309 = vunpack.c.l.b16 %v181
      %v310 = vunpack.c.l.b16 %v182
      %v311 = vunpack.c.l.b16 %v183
      %v312 = vunpack.c.l.b16 %v184
      %v313 = vunpack.c.l.b16 %v185
      %v314 = vunpack.c.l.b16 %v186
      %v315 = vunpack.c.l.b16 %v187
      %v316 = vunpack.c.l.b16 %v188
      %v317 = vunpack.c.l.b16 %v189
      %v318 = vunpack.c.l.b16 %v190
      %v319 = vunpack.c.l.b16 %v191
      %v320 = vpack.c.b16 %v305, %v304
      %v321 = vpack.c.b16 %v307, %v306
      %v322 = vpack.c.b16 %v309, %v308
      %v323 = vpack.c.b16 %v311, %v310
      %v324 = vpack.c.b16 %v313, %v312
      %v325 = vpack.c.b16 %v315, %v314
      %v326 = vpack.c.b16 %v317, %v316
      %v327 = vpack.c.b16 %v319, %v318
      %336 = vmatpush.bf16.msra.mxu0 %v327
      %337 = vmatpush.bf16.msra.mxu0 %v326
      %338 = vmatpush.bf16.msra.mxu0 %v325
      %339 = vmatpush.bf16.msra.mxu0 %v324
      %340 = vmatpush.bf16.msra.mxu0 %v323
      %341 = vmatpush.bf16.msra.mxu0 %v322
      %342 = vmatpush.bf16.msra.mxu0 %v321
      %343 = vmatpush.bf16.msra.mxu0 %v320
      %344 = vmatmul.bf16.gmra.mxu0 %v256
      %v345 = vpop.f32.mrf.mxu0
      %v346 = vadd.f32 0.0, %v345
      %v347 = vpop.f32.mrf.mxu0
      %v348 = vadd.f32 0.0, %v347
      %349 = vmatmul.bf16.gmra.mxu0 %v257
      %v350 = vpop.f32.mrf.mxu0
      %v351 = vadd.f32 0.0, %v350
      %v352 = vpop.f32.mrf.mxu0
      %v353 = vadd.f32 0.0, %v352
      %354 = vmatmul.bf16.gmra.mxu0 %v258
      %v355 = vpop.f32.mrf.mxu0
      %v356 = vadd.f32 0.0, %v355
      %v357 = vpop.f32.mrf.mxu0
      %v358 = vadd.f32 0.0, %v357
      %359 = vmatmul.bf16.gmra.mxu0 %v259
      %v360 = vpop.f32.mrf.mxu0
      %v361 = vadd.f32 0.0, %v360
      %v362 = vpop.f32.mrf.mxu0
      %v363 = vadd.f32 0.0, %v362
      %364 = vmatmul.bf16.gmra.mxu0 %v260
      %v365 = vpop.f32.mrf.mxu0
      %v366 = vadd.f32 0.0, %v365
      %v367 = vpop.f32.mrf.mxu0
      %v368 = vadd.f32 0.0, %v367
      %369 = vmatmul.bf16.gmra.mxu0 %v261
      %v370 = vpop.f32.mrf.mxu0
      %v371 = vadd.f32 0.0, %v370
      %v372 = vpop.f32.mrf.mxu0
      %v373 = vadd.f32 0.0, %v372
      %374 = vmatmul.bf16.gmra.mxu0 %v262
      %v375 = vpop.f32.mrf.mxu0
      %v376 = vadd.f32 0.0, %v375
      %v377 = vpop.f32.mrf.mxu0
      %v378 = vadd.f32 0.0, %v377
      %379 = vmatmul.bf16.gmra.mxu0 %v263
      %v380 = vpop.f32.mrf.mxu0
      %v381 = vadd.f32 0.0, %v380
      %v382 = vpop.f32.mrf.mxu0
      %v383 = vadd.f32 0.0, %v382
      %384 = vmatmul.bf16.gmra.mxu0 %v264
      %v385 = vpop.f32.mrf.mxu0
      %v386 = vadd.f32 0.0, %v385
      %v387 = vpop.f32.mrf.mxu0
      %v388 = vadd.f32 0.0, %v387
      %389 = vmatmul.bf16.gmra.mxu0 %v265
      %v390 = vpop.f32.mrf.mxu0
      %v391 = vadd.f32 0.0, %v390
      %v392 = vpop.f32.mrf.mxu0
      %v393 = vadd.f32 0.0, %v392
      %394 = vmatmul.bf16.gmra.mxu0 %v266
      %v395 = vpop.f32.mrf.mxu0
      %v396 = vadd.f32 0.0, %v395
      %v397 = vpop.f32.mrf.mxu0
      %v398 = vadd.f32 0.0, %v397
      %399 = vmatmul.bf16.gmra.mxu0 %v267
      %v400 = vpop.f32.mrf.mxu0
      %v401 = vadd.f32 0.0, %v400
      %v402 = vpop.f32.mrf.mxu0
      %v403 = vadd.f32 0.0, %v402
      %404 = vmatmul.bf16.gmra.mxu0 %v268
      %v405 = vpop.f32.mrf.mxu0
      %v406 = vadd.f32 0.0, %v405
      %v407 = vpop.f32.mrf.mxu0
      %v408 = vadd.f32 0.0, %v407
      %409 = vmatmul.bf16.gmra.mxu0 %v269
      %v410 = vpop.f32.mrf.mxu0
      %v411 = vadd.f32 0.0, %v410
      %v412 = vpop.f32.mrf.mxu0
      %v413 = vadd.f32 0.0, %v412
      %414 = vmatmul.bf16.gmra.mxu0 %v270
      %v415 = vpop.f32.mrf.mxu0
      %v416 = vadd.f32 0.0, %v415
      %v417 = vpop.f32.mrf.mxu0
      %v418 = vadd.f32 0.0, %v417
      %419 = vmatmul.bf16.gmra.mxu0 %v271
      %v420 = vpop.f32.mrf.mxu0
      %v421 = vadd.f32 0.0, %v420
      %v422 = vpop.f32.mrf.mxu0
      %v423 = vadd.f32 0.0, %v422
      %424 = vdwg.mxu0
      %425 = vmatpush.msra.mxu0 %v383
      %426 = vmatpush.msra.mxu0 %v381
      %427 = vmatpush.msra.mxu0 %v378
      %428 = vmatpush.msra.mxu0 %v376
      %429 = vmatpush.msra.mxu0 %v373
      %430 = vmatpush.msra.mxu0 %v371
      %431 = vmatpush.msra.mxu0 %v368
      %432 = vmatpush.msra.mxu0 %v366
      %433 = vmatpush.msra.mxu0 %v363
      %434 = vmatpush.msra.mxu0 %v361
      %435 = vmatpush.msra.mxu0 %v358
      %436 = vmatpush.msra.mxu0 %v356
      %437 = vmatpush.msra.mxu0 %v353
      %438 = vmatpush.msra.mxu0 %v351
      %439 = vmatpush.msra.mxu0 %v348
      %440 = vmatpush.msra.mxu0 %v346
      %441 = vmatmul.f32.gmra.mxu0 1.0
      %v442 = vpop.f32.mrf.mxu0
      %v443 = vadd.f32 0.0, %v442
      %444 = vdwg.mxu0
      %445 = vmatpush.msra.mxu0 %v423
      %446 = vmatpush.msra.mxu0 %v421
      %447 = vmatpush.msra.mxu0 %v418
      %448 = vmatpush.msra.mxu0 %v416
      %449 = vmatpush.msra.mxu0 %v413
      %450 = vmatpush.msra.mxu0 %v411
      %451 = vmatpush.msra.mxu0 %v408
      %452 = vmatpush.msra.mxu0 %v406
      %453 = vmatpush.msra.mxu0 %v403
      %454 = vmatpush.msra.mxu0 %v401
      %455 = vmatpush.msra.mxu0 %v398
      %456 = vmatpush.msra.mxu0 %v396
      %457 = vmatpush.msra.mxu0 %v393
      %458 = vmatpush.msra.mxu0 %v391
      %459 = vmatpush.msra.mxu0 %v388
      %460 = vmatpush.msra.mxu0 %v386
      %461 = vmatmul.f32.gmra.mxu0 1.0
      %v462 = vpop.f32.mrf.mxu0
      %v463 = vadd.f32 %v443, %v462
      %464 = vdwg.mxu0
      %v465 = vmul.f32 %v346, %v346
      %v466 = vmul.f32 %v348, %v348
      %v467 = vmul.f32 %v351, %v351
      %v468 = vmul.f32 %v353, %v353
      %v469 = vmul.f32 %v356, %v356
      %v470 = vmul.f32 %v358, %v358
      %v471 = vmul.f32 %v361, %v361
      %v472 = vmul.f32 %v363, %v363
      %v473 = vmul.f32 %v366, %v366
      %v474 = vmul.f32 %v368, %v368
      %v475 = vmul.f32 %v371, %v371
      %v476 = vmul.f32 %v373, %v373
      %v477 = vmul.f32 %v376, %v376
      %v478 = vmul.f32 %v378, %v378
      %v479 = vmul.f32 %v381, %v381
      %v480 = vmul.f32 %v383, %v383
      %v481 = vmul.f32 %v386, %v386
      %v482 = vmul.f32 %v388, %v388
      %v483 = vmul.f32 %v391, %v391
      %v484 = vmul.f32 %v393, %v393
      %v485 = vmul.f32 %v396, %v396
      %v486 = vmul.f32 %v398, %v398
      %v487 = vmul.f32 %v401, %v401
      %v488 = vmul.f32 %v403, %v403
      %v489 = vmul.f32 %v406, %v406
      %v490 = vmul.f32 %v408, %v408
      %v491 = vmul.f32 %v411, %v411
      %v492 = vmul.f32 %v413, %v413
      %v493 = vmul.f32 %v416, %v416
      %v494 = vmul.f32 %v418, %v418
      %v495 = vmul.f32 %v421, %v421
      %v496 = vmul.f32 %v423, %v423
      %497 = vmatpush.msra.mxu0 %v480
      %498 = vmatpush.msra.mxu0 %v479
      %499 = vmatpush.msra.mxu0 %v478
      %500 = vmatpush.msra.mxu0 %v477
      %501 = vmatpush.msra.mxu0 %v476
      %502 = vmatpush.msra.mxu0 %v475
      %503 = vmatpush.msra.mxu0 %v474
      %504 = vmatpush.msra.mxu0 %v473
      %505 = vmatpush.msra.mxu0 %v472
      %506 = vmatpush.msra.mxu0 %v471
      %507 = vmatpush.msra.mxu0 %v470
      %508 = vmatpush.msra.mxu0 %v469
      %509 = vmatpush.msra.mxu0 %v468
      %510 = vmatpush.msra.mxu0 %v467
      %511 = vmatpush.msra.mxu0 %v466
      %512 = vmatpush.msra.mxu0 %v465
      %513 = vmatmul.f32.gmra.mxu0 1.0
      %v514 = vpop.f32.mrf.mxu0
      %v515 = vadd.f32 0.0, %v514
      %516 = vdwg.mxu0
      %517 = vmatpush.msra.mxu0 %v496
      %518 = vmatpush.msra.mxu0 %v495
      %519 = vmatpush.msra.mxu0 %v494
      %520 = vmatpush.msra.mxu0 %v493
      %521 = vmatpush.msra.mxu0 %v492
      %522 = vmatpush.msra.mxu0 %v491
      %523 = vmatpush.msra.mxu0 %v490
      %524 = vmatpush.msra.mxu0 %v489
      %525 = vmatpush.msra.mxu0 %v488
      %526 = vmatpush.msra.mxu0 %v487
      %527 = vmatpush.msra.mxu0 %v486
      %528 = vmatpush.msra.mxu0 %v485
      %529 = vmatpush.msra.mxu0 %v484
      %530 = vmatpush.msra.mxu0 %v483
      %531 = vmatpush.msra.mxu0 %v482
      %532 = vmatpush.msra.mxu0 %v481
      %533 = vmatmul.f32.gmra.mxu0 1.0
      %v534 = vpop.f32.mrf.mxu0
      %v535 = vadd.f32 %v515, %v534
      %536 = vdwg.mxu0
      %v538 = vrot.slane %v535, 7
      %vm540 = vcmask 1040384
      %v541 = vsel %vm540, %v463, %v538
      %vm542 = vcmask 1041408
      %v543 = vsel %vm542, %v541, 0.0
      %544 = vst [vmem:[%s143] sm:$0xff] %v543
      %p545 = scmp.lt.s32.totalorder %s13, 1
      %s546 = scalar_select %p545, %s13, 1
      %s547 = smul.addr %s546, 8
      %s548 = scalar_lea.vmem %s2, %s547
      // Predicated region
      $region29: #{cnn_block_forward.2} parent=27 // pred_check
        %p549 = pneg %p78
      $region30: #{cnn_block_forward.2} parent=27 // pred_check_branch
        %551 = sbr.rel (%p549) target = $region32
      $region31: #{cnn_block_forward.2} parent=27 // pred_region
        _
      $region32: #{cnn_block_forward.2} parent=27 // pred_fallthru
        _
    $region28: #{cnn_block_forward.2} parent=5 // pred_fallthru
      _
    %p552 = scmp.le.s32.totalorder 2, %s8
    // Predicated region
    $region33: #{cnn_block_forward.2} parent=5 // pred_check
      %p553 = pneg %p552
    $region34: #{cnn_block_forward.2} parent=5 // pred_check_branch
      %555 = sbr.rel (%p553) target = $region36
    $region35: #{cnn_block_forward.2} parent=5 // pred_region
      %s556 = ssub.s32 %s8, 2
      // Predicated region
      $region37: #{cnn_block_forward.2} parent=35 // pred_check
        %p557 = pneg %p84
      $region38: #{cnn_block_forward.2} parent=35 // pred_check_branch
        %559 = sbr.rel (%p557) target = $region40
      $region39: #{cnn_block_forward.2} parent=35 // pred_region
        %p560 = scmp.lt.s32.totalorder %s14, 1
        %s561 = scalar_select %p560, %s14, 1
        %s562 = smul.addr %s561, 8
        %s563 = scalar_lea.vmem %s2, %s562
      $region40: #{cnn_block_forward.2} parent=35 // pred_fallthru
        _
    $region36: #{cnn_block_forward.2} parent=5 // pred_fallthru
      _
  $region6: #{cnn_block_forward.2} parent=0 // loop_footer
    %s12 = sadd.s32 1, %s8
  $region7: #{cnn_block_forward.2} parent=0 // loop_footer_branch
    %7 = sbr.rel target = $region3
  $region8: #{cnn_block_forward.2} parent=0 // loop_exit
    _

// kernel: cnn_block_forward.3
$region0: #{cnn_block_forward.3}
  #allocation0 [shape = 'u32[]', space=smem, size = 0x4, offset = 0x4, fixed_abs, tag = 'smem constant byte address 0x4 - core index']
  #allocation1 [shape = 'u32[72,128]{1,0:T(1,128)}', space=vmem, size = 0x9000, scoped, tag = 'internal scratch']
  %s0 = inlined_call_operand.vmem [shape: bf16[512,128], index: 0, kind: input, shape index: {}]
  %s1 = inlined_call_operand.vmem [shape: bf16[128,128], index: 1, kind: input, shape index: {}]
  %s2 = inlined_call_operand.vmem [shape: f32[1,128], index: 2, kind: input, shape index: {}]
  %s3 = inlined_call_operand.vmem [shape: f32[1,128], index: 3, kind: input, shape index: {}]
  %s4 = inlined_call_operand.vmem [shape: f32[512,128], index: 4, kind: output, shape index: {}]
  %s5 = sld [smem:[#allocation0]]
  $region49: #{cnn_block_forward.3} parent=0
    _
  %s7 = ssub.s32 1, %s5
  %s8 = scalar_select 0, %s7, %s5
  loop: start=0, step=1, limit=4
  $region2: #{cnn_block_forward.3} parent=0 // loop_pre_header
    _
  $region3: #{cnn_block_forward.3} parent=0 // loop_header
    %s10 = sphi 0, %s14
    %p11 = scmp.ge.s32.totalorder %s10, 4
    %s20 = sphi 0, %s22
    %s23 = sphi 0, %s20
    %s24 = sphi 0, %s23
    %s40 = sphi 0, %s24
    %s44 = sphi 0, %s44
    %s46 = sphi 0, %s44
    %s47 = sphi 0, %s46
    %s61 = sphi 0, %s47
    %s65 = sphi 0, %s65
    %s67 = sphi 0, %s65
    %s68 = sphi 0, %s67
    %s82 = sphi 0, %s68
    %s86 = sphi 0, %s86
    %s88 = sphi 0, %s86
    %s89 = sphi 0, %s88
    %s103 = sphi 0, %s89
    %s109 = sphi 0, %s111
    %s112 = sphi 0, %s109
    %s113 = sphi 0, %s112
    %s129 = sphi 0, %s113
  $region4: #{cnn_block_forward.3} parent=0 // loop_header_branch
    %13 = sbr.rel (%p11) target = $region8
  $region5: #{cnn_block_forward.3} parent=0 // loop_body
    %s15 = ssub.s32 %s10, 1
    %s16 = ssub.s32 %s10, 2
    %s17 = sadd.s32 %s10, 1
    %s18 = ssub.s32 %s10, %s17
    %p19 = scmp.eq.s32.totalorder %s18, 0
    %s21 = sadd.s32 %s20, 1
    %s22 = scalar_select %p19, %s20, %s21
    %p25 = pneg %p19
    %p26 = scmp.eq.s32.totalorder %s10, 1
    %p27 = por %p25, %p26
    %p28 = scmp.ne.s32.totalorder %s20, %s23
    %p29 = scmp.eq.s32.totalorder %s10, 0
    %p30 = por %p28, %p29
    %p31 = scmp.ne.s32.totalorder %s20, %s23
    %p32 = scmp.eq.s32.totalorder %s15, 1
    %p33 = por %p31, %p32
    %p34 = scmp.ne.s32.totalorder %s23, %s24
    %p35 = scmp.eq.s32.totalorder %s15, 0
    %p36 = por %p34, %p35
    %p37 = scmp.ne.s32.totalorder %s23, %s24
    %p38 = scmp.eq.s32.totalorder %s16, 1
    %p39 = por %p37, %p38
    %p41 = scmp.ne.s32.totalorder %s24, %s40
    %p42 = scmp.eq.s32.totalorder %s16, 0
    %p43 = por %p41, %p42
    %s45 = sadd.s32 %s44, 1
    %p48 = scmp.eq.s32.totalorder %s10, 1
    %p49 = scmp.ne.s32.totalorder %s44, %s46
    %p50 = scmp.eq.s32.totalorder %s10, 0
    %p51 = por %p49, %p50
    %p52 = scmp.ne.s32.totalorder %s44, %s46
    %p53 = scmp.eq.s32.totalorder %s15, 1
    %p54 = por %p52, %p53
    %p55 = scmp.ne.s32.totalorder %s46, %s47
    %p56 = scmp.eq.s32.totalorder %s15, 0
    %p57 = por %p55, %p56
    %p58 = scmp.ne.s32.totalorder %s46, %s47
    %p59 = scmp.eq.s32.totalorder %s16, 1
    %p60 = por %p58, %p59
    %p62 = scmp.ne.s32.totalorder %s47, %s61
    %p63 = scmp.eq.s32.totalorder %s16, 0
    %p64 = por %p62, %p63
    %s66 = sadd.s32 %s65, 1
    %p69 = scmp.eq.s32.totalorder %s10, 1
    %p70 = scmp.ne.s32.totalorder %s65, %s67
    %p71 = scmp.eq.s32.totalorder %s10, 0
    %p72 = por %p70, %p71
    %p73 = scmp.ne.s32.totalorder %s65, %s67
    %p74 = scmp.eq.s32.totalorder %s15, 1
    %p75 = por %p73, %p74
    %p76 = scmp.ne.s32.totalorder %s67, %s68
    %p77 = scmp.eq.s32.totalorder %s15, 0
    %p78 = por %p76, %p77
    %p79 = scmp.ne.s32.totalorder %s67, %s68
    %p80 = scmp.eq.s32.totalorder %s16, 1
    %p81 = por %p79, %p80
    %p83 = scmp.ne.s32.totalorder %s68, %s82
    %p84 = scmp.eq.s32.totalorder %s16, 0
    %p85 = por %p83, %p84
    %s87 = sadd.s32 %s86, 1
    %p90 = scmp.eq.s32.totalorder %s10, 1
    %p91 = scmp.ne.s32.totalorder %s86, %s88
    %p92 = scmp.eq.s32.totalorder %s10, 0
    %p93 = por %p91, %p92
    %p94 = scmp.ne.s32.totalorder %s86, %s88
    %p95 = scmp.eq.s32.totalorder %s15, 1
    %p96 = por %p94, %p95
    %p97 = scmp.ne.s32.totalorder %s88, %s89
    %p98 = scmp.eq.s32.totalorder %s15, 0
    %p99 = por %p97, %p98
    %p100 = scmp.ne.s32.totalorder %s88, %s89
    %p101 = scmp.eq.s32.totalorder %s16, 1
    %p102 = por %p100, %p101
    %p104 = scmp.ne.s32.totalorder %s89, %s103
    %p105 = scmp.eq.s32.totalorder %s16, 0
    %p106 = por %p104, %p105
    %s107 = ssub.s32 %s10, %s17
    %p108 = scmp.eq.s32.totalorder %s107, 0
    %s110 = sadd.s32 %s109, 1
    %s111 = scalar_select %p108, %s109, %s110
    %p114 = pneg %p108
    %p115 = scmp.eq.s32.totalorder %s10, 1
    %p116 = por %p114, %p115
    %p117 = scmp.ne.s32.totalorder %s109, %s112
    %p118 = scmp.eq.s32.totalorder %s10, 0
    %p119 = por %p117, %p118
    %p120 = scmp.ne.s32.totalorder %s109, %s112
    %p121 = scmp.eq.s32.totalorder %s15, 1
    %p122 = por %p120, %p121
    %p123 = scmp.ne.s32.totalorder %s112, %s113
    %p124 = scmp.eq.s32.totalorder %s15, 0
    %p125 = por %p123, %p124
    %p126 = scmp.ne.s32.totalorder %s112, %s113
    %p127 = scmp.eq.s32.totalorder %s16, 1
    %p128 = por %p126, %p127
    %p130 = scmp.ne.s32.totalorder %s113, %s129
    %p131 = scmp.eq.s32.totalorder %s16, 0
    %p132 = por %p130, %p131
    %p133 = scmp.le.s32.totalorder 1, %s10
    %p134 = scmp.lt.s32.totalorder %s10, 3
    %p135 = pnand %p133, %p134
    %p136 = pneg %p135
    // Predicated region
    $region9: #{cnn_block_forward.3} parent=5 // pred_check
      _
    $region10: #{cnn_block_forward.3} parent=5 // pred_check_branch
      %138 = sbr.rel (%p135) target = $region12
    $region11: #{cnn_block_forward.3} parent=5 // pred_region
      %s139 = ssub.s32 %s10, 1
      // Predicated region
      $region13: #{cnn_block_forward.3} parent=11 // pred_check
        %p140 = pneg %p57
      $region14: #{cnn_block_forward.3} parent=11 // pred_check_branch
        %142 = sbr.rel (%p140) target = $region16
      $region15: #{cnn_block_forward.3} parent=11 // pred_region
        _
      $region16: #{cnn_block_forward.3} parent=11 // pred_fallthru
        _
      // Predicated region
      $region17: #{cnn_block_forward.3} parent=11 // pred_check
        %p143 = pneg %p78
      $region18: #{cnn_block_forward.3} parent=11 // pred_check_branch
        %145 = sbr.rel (%p143) target = $region20
      $region19: #{cnn_block_forward.3} parent=11 // pred_region
        _
      $region20: #{cnn_block_forward.3} parent=11 // pred_fallthru
        _
      // Predicated region
      $region21: #{cnn_block_forward.3} parent=11 // pred_check
        %p146 = pneg %p99
      $region22: #{cnn_block_forward.3} parent=11 // pred_check_branch
        %148 = sbr.rel (%p146) target = $region24
      $region23: #{cnn_block_forward.3} parent=11 // pred_region
        _
      $region24: #{cnn_block_forward.3} parent=11 // pred_fallthru
        _
    $region12: #{cnn_block_forward.3} parent=5 // pred_fallthru
      _
    %p149 = scmp.lt.s32.totalorder %s10, 2
    // Predicated region
    $region25: #{cnn_block_forward.3} parent=5 // pred_check
      %p150 = pneg %p149
    $region26: #{cnn_block_forward.3} parent=5 // pred_check_branch
      %152 = sbr.rel (%p150) target = $region28
    $region27: #{cnn_block_forward.3} parent=5 // pred_region
      // Predicated region
      $region29: #{cnn_block_forward.3} parent=27 // pred_check
        %p153 = pneg %p30
      $region30: #{cnn_block_forward.3} parent=27 // pred_check_branch
        %155 = sbr.rel (%p153) target = $region32
      $region31: #{cnn_block_forward.3} parent=27 // pred_region
        %s156 = smul.u32 32, %s10
        %p157 = scmp.lt.s32.totalorder %s156, 63
        %s158 = scalar_select %p157, %s156, 63
        %s159 = smul.addr %s158, 4
        %s160 = scalar_lea.vmem %s0, %s159
        %s161 = smul.u32 32, %s10
      $region32: #{cnn_block_forward.3} parent=27 // pred_fallthru
        _
    $region28: #{cnn_block_forward.3} parent=5 // pred_fallthru
      _
    %p162 = scmp.le.s32.totalorder 1, %s10
    %p163 = scmp.lt.s32.totalorder %s10, 3
    %p164 = pnand %p162, %p163
    %p165 = pneg %p164
    // Predicated region
    $region33: #{cnn_block_forward.3} parent=5 // pred_check
      _
    $region34: #{cnn_block_forward.3} parent=5 // pred_check_branch
      %167 = sbr.rel (%p164) target = $region36
    $region35: #{cnn_block_forward.3} parent=5 // pred_region
      %s168 = ssub.s32 %s10, 1
      %s169 = smul.u32 32, %s15
      %p170 = scmp.lt.s32.totalorder %s169, 63
      %s171 = scalar_select %p170, %s169, 63
      %s172 = smul.addr %s171, 4
      %s173 = scalar_lea.vmem %s0, %s172
      %p174 = pneg %p36
      %p175 = pneg %p33
      %p176 = pneg %p57
      %p177 = pneg %p54
      %p178 = pneg %p78
      %p179 = pneg %p75
      %p180 = pneg %p99
      %p181 = pneg %p96
      %p182 = pneg %p125
      %p183 = pneg %p122
      %s184 = smul.u32 32, %s15
      %p185 = scmp.lt.s32.totalorder %s184, 63
      %s186 = scalar_select %p185, %s184, 63
      %s187 = smul.addr %s186, 8
      %s188 = scalar_lea.vmem %s4, %s187
      %s189 = smul.u32 32, %s15
      %p190 = scmp.lt.s32.totalorder %s189, 63
      %s191 = scalar_select %p190, %s189, 63
      %s192 = smul.addr %s191, 4
      %s193 = scalar_lea.vmem %s0, %s192
      %s194 = smul.u32 32, %s15
      %s195 = smul.u32 32, %s15
      %p196 = scmp.lt.s32.totalorder %s195, 63
      %s197 = scalar_select %p196, %s195, 63
      %s198 = smul.addr %s197, 8
      %s199 = scalar_lea.vmem %s4, %s198
      %s200 = smul.u32 32, %s15
      %v201 = vld [vmem:[%s193] sm:$0xf]
      %v202 = vld [vmem:[%s193 + $0x4] sm:$0xf]
      %v203 = vld [vmem:[%s193 + $0x8] sm:$0xf]
      %v204 = vld [vmem:[%s193 + $0xc] sm:$0xf]
      %v205 = vld [vmem:[%s193 + $0x10] sm:$0xf]
      %v206 = vld [vmem:[%s193 + $0x14] sm:$0xf]
      %v207 = vld [vmem:[%s193 + $0x18] sm:$0xf]
      %v208 = vld [vmem:[%s193 + $0x1c] sm:$0xf]
      %v209 = vld [vmem:[%s193 + $0x20] sm:$0xf]
      %v210 = vld [vmem:[%s193 + $0x24] sm:$0xf]
      %v211 = vld [vmem:[%s193 + $0x28] sm:$0xf]
      %v212 = vld [vmem:[%s193 + $0x2c] sm:$0xf]
      %v213 = vld [vmem:[%s193 + $0x30] sm:$0xf]
      %v214 = vld [vmem:[%s193 + $0x34] sm:$0xf]
      %v215 = vld [vmem:[%s193 + $0x38] sm:$0xf]
      %v216 = vld [vmem:[%s193 + $0x3c] sm:$0xf]
      %v217 = vld [vmem:[%s193 + $0x40] sm:$0xf]
      %v218 = vld [vmem:[%s193 + $0x44] sm:$0xf]
      %v219 = vld [vmem:[%s193 + $0x48] sm:$0xf]
      %v220 = vld [vmem:[%s193 + $0x4c] sm:$0xf]
      %v221 = vld [vmem:[%s193 + $0x50] sm:$0xf]
      %v222 = vld [vmem:[%s193 + $0x54] sm:$0xf]
      %v223 = vld [vmem:[%s193 + $0x58] sm:$0xf]
      %v224 = vld [vmem:[%s193 + $0x5c] sm:$0xf]
      %v225 = vld [vmem:[%s193 + $0x60] sm:$0xf]
      %v226 = vld [vmem:[%s193 + $0x64] sm:$0xf]
      %v227 = vld [vmem:[%s193 + $0x68] sm:$0xf]
      %v228 = vld [vmem:[%s193 + $0x6c] sm:$0xf]
      %v229 = vld [vmem:[%s193 + $0x70] sm:$0xf]
      %v230 = vld [vmem:[%s193 + $0x74] sm:$0xf]
      %v231 = vld [vmem:[%s193 + $0x78] sm:$0xf]
      %v232 = vld [vmem:[%s193 + $0x7c] sm:$0xf]
      %v233 = vld [vmem:[%s1] sm:$0xf]
      %v234 = vld [vmem:[%s1 + $0x4] sm:$0xf]
      %v235 = vld [vmem:[%s1 + $0x8] sm:$0xf]
      %v236 = vld [vmem:[%s1 + $0xc] sm:$0xf]
      %v237 = vld [vmem:[%s1 + $0x10] sm:$0xf]
      %v238 = vld [vmem:[%s1 + $0x14] sm:$0xf]
      %v239 = vld [vmem:[%s1 + $0x18] sm:$0xf]
      %v240 = vld [vmem:[%s1 + $0x1c] sm:$0xf]
      %v241 = vld [vmem:[%s1 + $0x20] sm:$0xf]
      %v242 = vld [vmem:[%s1 + $0x24] sm:$0xf]
      %v243 = vld [vmem:[%s1 + $0x28] sm:$0xf]
      %v244 = vld [vmem:[%s1 + $0x2c] sm:$0xf]
      %v245 = vld [vmem:[%s1 + $0x30] sm:$0xf]
      %v246 = vld [vmem:[%s1 + $0x34] sm:$0xf]
      %v247 = vld [vmem:[%s1 + $0x38] sm:$0xf]
      %v248 = vld [vmem:[%s1 + $0x3c] sm:$0xf]
      %v281 = vunpack.c.l.b16 %v201
      %v282 = vunpack.c.l.b16 %v202
      %v283 = vunpack.c.l.b16 %v203
      %v284 = vunpack.c.l.b16 %v204
      %v285 = vunpack.c.l.b16 %v205
      %v286 = vunpack.c.l.b16 %v206
      %v287 = vunpack.c.l.b16 %v207
      %v288 = vunpack.c.l.b16 %v208
      %v289 = vunpack.c.l.b16 %v209
      %v290 = vunpack.c.l.b16 %v210
      %v291 = vunpack.c.l.b16 %v211
      %v292 = vunpack.c.l.b16 %v212
      %v293 = vunpack.c.l.b16 %v213
      %v294 = vunpack.c.l.b16 %v214
      %v295 = vunpack.c.l.b16 %v215
      %v296 = vunpack.c.l.b16 %v216
      %v297 = vunpack.c.l.b16 %v217
      %v298 = vunpack.c.l.b16 %v218
      %v299 = vunpack.c.l.b16 %v219
      %v300 = vunpack.c.l.b16 %v220
      %v301 = vunpack.c.l.b16 %v221
      %v302 = vunpack.c.l.b16 %v222
      %v303 = vunpack.c.l.b16 %v223
      %v304 = vunpack.c.l.b16 %v224
      %v305 = vunpack.c.l.b16 %v225
      %v306 = vunpack.c.l.b16 %v226
      %v307 = vunpack.c.l.b16 %v227
      %v308 = vunpack.c.l.b16 %v228
      %v309 = vunpack.c.l.b16 %v229
      %v310 = vunpack.c.l.b16 %v230
      %v311 = vunpack.c.l.b16 %v231
      %v312 = vunpack.c.l.b16 %v232
      %v313 = vpack.c.b16 %v282, %v281
      %v314 = vpack.c.b16 %v284, %v283
      %v315 = vpack.c.b16 %v286, %v285
      %v316 = vpack.c.b16 %v288, %v287
      %v317 = vpack.c.b16 %v290, %v289
      %v318 = vpack.c.b16 %v292, %v291
      %v319 = vpack.c.b16 %v294, %v293
      %v320 = vpack.c.b16 %v296, %v295
      %v321 = vpack.c.b16 %v298, %v297
      %v322 = vpack.c.b16 %v300, %v299
      %v323 = vpack.c.b16 %v302, %v301
      %v324 = vpack.c.b16 %v304, %v303
      %v325 = vpack.c.b16 %v306, %v305
      %v326 = vpack.c.b16 %v308, %v307
      %v327 = vpack.c.b16 %v310, %v309
      %v328 = vpack.c.b16 %v312, %v311
      %v361 = vunpack.c.l.b16 %v233
      %v362 = vunpack.c.l.b16 %v234
      %v363 = vunpack.c.l.b16 %v235
      %v364 = vunpack.c.l.b16 %v236
      %v365 = vunpack.c.l.b16 %v237
      %v366 = vunpack.c.l.b16 %v238
      %v367 = vunpack.c.l.b16 %v239
      %v368 = vunpack.c.l.b16 %v240
      %v369 = vunpack.c.l.b16 %v241
      %v370 = vunpack.c.l.b16 %v242
      %v371 = vunpack.c.l.b16 %v243
      %v372 = vunpack.c.l.b16 %v244
      %v373 = vunpack.c.l.b16 %v245
      %v374 = vunpack.c.l.b16 %v246
      %v375 = vunpack.c.l.b16 %v247
      %v376 = vunpack.c.l.b16 %v248
      %v377 = vpack.c.b16 %v362, %v361
      %v378 = vpack.c.b16 %v364, %v363
      %v379 = vpack.c.b16 %v366, %v365
      %v380 = vpack.c.b16 %v368, %v367
      %v381 = vpack.c.b16 %v370, %v369
      %v382 = vpack.c.b16 %v372, %v371
      %v383 = vpack.c.b16 %v374, %v373
      %v384 = vpack.c.b16 %v376, %v375
      %393 = vmatpush.bf16.msra.mxu0 %v384
      %394 = vmatpush.bf16.msra.mxu0 %v383
      %395 = vmatpush.bf16.msra.mxu0 %v382
      %396 = vmatpush.bf16.msra.mxu0 %v381
      %397 = vmatpush.bf16.msra.mxu0 %v380
      %398 = vmatpush.bf16.msra.mxu0 %v379
      %399 = vmatpush.bf16.msra.mxu0 %v378
      %400 = vmatpush.bf16.msra.mxu0 %v377
      %401 = vmatmul.bf16.gmra.mxu0 %v313
      %v402 = vpop.f32.mrf.mxu0
      %v403 = vadd.f32 0.0, %v402
      %v404 = vpop.f32.mrf.mxu0
      %v405 = vadd.f32 0.0, %v404
      %406 = vmatmul.bf16.gmra.mxu0 %v314
      %v407 = vpop.f32.mrf.mxu0
      %v408 = vadd.f32 0.0, %v407
      %v409 = vpop.f32.mrf.mxu0
      %v410 = vadd.f32 0.0, %v409
      %411 = vmatmul.bf16.gmra.mxu0 %v315
      %v412 = vpop.f32.mrf.mxu0
      %v413 = vadd.f32 0.0, %v412
      %v414 = vpop.f32.mrf.mxu0
      %v415 = vadd.f32 0.0, %v414
      %416 = vmatmul.bf16.gmra.mxu0 %v316
      %v417 = vpop.f32.mrf.mxu0
      %v418 = vadd.f32 0.0, %v417
      %v419 = vpop.f32.mrf.mxu0
      %v420 = vadd.f32 0.0, %v419
      %421 = vmatmul.bf16.gmra.mxu0 %v317
      %v422 = vpop.f32.mrf.mxu0
      %v423 = vadd.f32 0.0, %v422
      %v424 = vpop.f32.mrf.mxu0
      %v425 = vadd.f32 0.0, %v424
      %426 = vmatmul.bf16.gmra.mxu0 %v318
      %v427 = vpop.f32.mrf.mxu0
      %v428 = vadd.f32 0.0, %v427
      %v429 = vpop.f32.mrf.mxu0
      %v430 = vadd.f32 0.0, %v429
      %431 = vmatmul.bf16.gmra.mxu0 %v319
      %v432 = vpop.f32.mrf.mxu0
      %v433 = vadd.f32 0.0, %v432
      %v434 = vpop.f32.mrf.mxu0
      %v435 = vadd.f32 0.0, %v434
      %436 = vmatmul.bf16.gmra.mxu0 %v320
      %v437 = vpop.f32.mrf.mxu0
      %v438 = vadd.f32 0.0, %v437
      %v439 = vpop.f32.mrf.mxu0
      %v440 = vadd.f32 0.0, %v439
      %441 = vmatmul.bf16.gmra.mxu0 %v321
      %v442 = vpop.f32.mrf.mxu0
      %v443 = vadd.f32 0.0, %v442
      %v444 = vpop.f32.mrf.mxu0
      %v445 = vadd.f32 0.0, %v444
      %446 = vmatmul.bf16.gmra.mxu0 %v322
      %v447 = vpop.f32.mrf.mxu0
      %v448 = vadd.f32 0.0, %v447
      %v449 = vpop.f32.mrf.mxu0
      %v450 = vadd.f32 0.0, %v449
      %451 = vmatmul.bf16.gmra.mxu0 %v323
      %v452 = vpop.f32.mrf.mxu0
      %v453 = vadd.f32 0.0, %v452
      %v454 = vpop.f32.mrf.mxu0
      %v455 = vadd.f32 0.0, %v454
      %456 = vmatmul.bf16.gmra.mxu0 %v324
      %v457 = vpop.f32.mrf.mxu0
      %v458 = vadd.f32 0.0, %v457
      %v459 = vpop.f32.mrf.mxu0
      %v460 = vadd.f32 0.0, %v459
      %461 = vmatmul.bf16.gmra.mxu0 %v325
      %v462 = vpop.f32.mrf.mxu0
      %v463 = vadd.f32 0.0, %v462
      %v464 = vpop.f32.mrf.mxu0
      %v465 = vadd.f32 0.0, %v464
      %466 = vmatmul.bf16.gmra.mxu0 %v326
      %v467 = vpop.f32.mrf.mxu0
      %v468 = vadd.f32 0.0, %v467
      %v469 = vpop.f32.mrf.mxu0
      %v470 = vadd.f32 0.0, %v469
      %471 = vmatmul.bf16.gmra.mxu0 %v327
      %v472 = vpop.f32.mrf.mxu0
      %v473 = vadd.f32 0.0, %v472
      %v474 = vpop.f32.mrf.mxu0
      %v475 = vadd.f32 0.0, %v474
      %476 = vmatmul.bf16.gmra.mxu0 %v328
      %v477 = vpop.f32.mrf.mxu0
      %v478 = vadd.f32 0.0, %v477
      %v479 = vpop.f32.mrf.mxu0
      %v480 = vadd.f32 0.0, %v479
      %481 = vdwg.mxu0
      %v482 = vld [vmem:[%s2] sm:$0x1]
      %v484 = vperm.slane %v482, 0
      %v486 = vmul.f32 %v403, %v484
      %v487 = vmul.f32 %v405, %v484
      %v488 = vmul.f32 %v408, %v484
      %v489 = vmul.f32 %v410, %v484
      %v490 = vmul.f32 %v413, %v484
      %v491 = vmul.f32 %v415, %v484
      %v492 = vmul.f32 %v418, %v484
      %v493 = vmul.f32 %v420, %v484
      %v494 = vmul.f32 %v423, %v484
      %v495 = vmul.f32 %v425, %v484
      %v496 = vmul.f32 %v428, %v484
      %v497 = vmul.f32 %v430, %v484
      %v498 = vmul.f32 %v433, %v484
      %v499 = vmul.f32 %v435, %v484
      %v500 = vmul.f32 %v438, %v484
      %v501 = vmul.f32 %v440, %v484
      %v502 = vmul.f32 %v443, %v484
      %v503 = vmul.f32 %v445, %v484
      %v504 = vmul.f32 %v448, %v484
      %v505 = vmul.f32 %v450, %v484
      %v506 = vmul.f32 %v453, %v484
      %v507 = vmul.f32 %v455, %v484
      %v508 = vmul.f32 %v458, %v484
      %v509 = vmul.f32 %v460, %v484
      %v510 = vmul.f32 %v463, %v484
      %v511 = vmul.f32 %v465, %v484
      %v512 = vmul.f32 %v468, %v484
      %v513 = vmul.f32 %v470, %v484
      %v514 = vmul.f32 %v473, %v484
      %v515 = vmul.f32 %v475, %v484
      %v516 = vmul.f32 %v478, %v484
      %v517 = vmul.f32 %v480, %v484
      %v518 = vld [vmem:[%s3] sm:$0x1]
      %v520 = vperm.slane %v518, 0
      %v522 = vadd.f32 %v486, %v520
      %v523 = vadd.f32 %v487, %v520
      %v524 = vadd.f32 %v488, %v520
      %v525 = vadd.f32 %v489, %v520
      %v526 = vadd.f32 %v490, %v520
      %v527 = vadd.f32 %v491, %v520
      %v528 = vadd.f32 %v492, %v520
      %v529 = vadd.f32 %v493, %v520
      %v530 = vadd.f32 %v494, %v520
      %v531 = vadd.f32 %v495, %v520
      %v532 = vadd.f32 %v496, %v520
      %v533 = vadd.f32 %v497, %v520
      %v534 = vadd.f32 %v498, %v520
      %v535 = vadd.f32 %v499, %v520
      %v536 = vadd.f32 %v500, %v520
      %v537 = vadd.f32 %v501, %v520
      %v538 = vadd.f32 %v502, %v520
      %v539 = vadd.f32 %v503, %v520
      %v540 = vadd.f32 %v504, %v520
      %v541 = vadd.f32 %v505, %v520
      %v542 = vadd.f32 %v506, %v520
      %v543 = vadd.f32 %v507, %v520
      %v544 = vadd.f32 %v508, %v520
      %v545 = vadd.f32 %v509, %v520
      %v546 = vadd.f32 %v510, %v520
      %v547 = vadd.f32 %v511, %v520
      %v548 = vadd.f32 %v512, %v520
      %v549 = vadd.f32 %v513, %v520
      %v550 = vadd.f32 %v514, %v520
      %v551 = vadd.f32 %v515, %v520
      %v552 = vadd.f32 %v516, %v520
      %v553 = vadd.f32 %v517, %v520
      %vm554 = vcmp.ge.f32.partialorder %v522, 0.0
      %vm555 = vcmp.ge.f32.partialorder %v523, 0.0
      %vm556 = vcmp.ge.f32.partialorder %v524, 0.0
      %vm557 = vcmp.ge.f32.partialorder %v525, 0.0
      %vm558 = vcmp.ge.f32.partialorder %v526, 0.0
      %vm559 = vcmp.ge.f32.partialorder %v527, 0.0
      %vm560 = vcmp.ge.f32.partialorder %v528, 0.0
      %vm561 = vcmp.ge.f32.partialorder %v529, 0.0
      %vm562 = vcmp.ge.f32.partialorder %v530, 0.0
      %vm563 = vcmp.ge.f32.partialorder %v531, 0.0
      %vm564 = vcmp.ge.f32.partialorder %v532, 0.0
      %vm565 = vcmp.ge.f32.partialorder %v533, 0.0
      %vm566 = vcmp.ge.f32.partialorder %v534, 0.0
      %vm567 = vcmp.ge.f32.partialorder %v535, 0.0
      %vm568 = vcmp.ge.f32.partialorder %v536, 0.0
      %vm569 = vcmp.ge.f32.partialorder %v537, 0.0
      %vm570 = vcmp.ge.f32.partialorder %v538, 0.0
      %vm571 = vcmp.ge.f32.partialorder %v539, 0.0
      %vm572 = vcmp.ge.f32.partialorder %v540, 0.0
      %vm573 = vcmp.ge.f32.partialorder %v541, 0.0
      %vm574 = vcmp.ge.f32.partialorder %v542, 0.0
      %vm575 = vcmp.ge.f32.partialorder %v543, 0.0
      %vm576 = vcmp.ge.f32.partialorder %v544, 0.0
      %vm577 = vcmp.ge.f32.partialorder %v545, 0.0
      %vm578 = vcmp.ge.f32.partialorder %v546, 0.0
      %vm579 = vcmp.ge.f32.partialorder %v547, 0.0
      %vm580 = vcmp.ge.f32.partialorder %v548, 0.0
      %vm581 = vcmp.ge.f32.partialorder %v549, 0.0
      %vm582 = vcmp.ge.f32.partialorder %v550, 0.0
      %vm583 = vcmp.ge.f32.partialorder %v551, 0.0
      %vm584 = vcmp.ge.f32.partialorder %v552, 0.0
      %vm585 = vcmp.ge.f32.partialorder %v553, 0.0
      %v586 = vmul.f32 %v522, 0.1
      %v587 = vmul.f32 %v523, 0.1
      %v588 = vmul.f32 %v524, 0.1
      %v589 = vmul.f32 %v525, 0.1
      %v590 = vmul.f32 %v526, 0.1
      %v591 = vmul.f32 %v527, 0.1
      %v592 = vmul.f32 %v528, 0.1
      %v593 = vmul.f32 %v529, 0.1
      %v594 = vmul.f32 %v530, 0.1
      %v595 = vmul.f32 %v531, 0.1
      %v596 = vmul.f32 %v532, 0.1
      %v597 = vmul.f32 %v533, 0.1
      %v598 = vmul.f32 %v534, 0.1
      %v599 = vmul.f32 %v535, 0.1
      %v600 = vmul.f32 %v536, 0.1
      %v601 = vmul.f32 %v537, 0.1
      %v602 = vmul.f32 %v538, 0.1
      %v603 = vmul.f32 %v539, 0.1
      %v604 = vmul.f32 %v540, 0.1
      %v605 = vmul.f32 %v541, 0.1
      %v606 = vmul.f32 %v542, 0.1
      %v607 = vmul.f32 %v543, 0.1
      %v608 = vmul.f32 %v544, 0.1
      %v609 = vmul.f32 %v545, 0.1
      %v610 = vmul.f32 %v546, 0.1
      %v611 = vmul.f32 %v547, 0.1
      %v612 = vmul.f32 %v548, 0.1
      %v613 = vmul.f32 %v549, 0.1
      %v614 = vmul.f32 %v550, 0.1
      %v615 = vmul.f32 %v551, 0.1
      %v616 = vmul.f32 %v552, 0.1
      %v617 = vmul.f32 %v553, 0.1
      %v618 = vsel %vm554, %v522, %v586
      %v619 = vsel %vm555, %v523, %v587
      %v620 = vsel %vm556, %v524, %v588
      %v621 = vsel %vm557, %v525, %v589
      %v622 = vsel %vm558, %v526, %v590
      %v623 = vsel %vm559, %v527, %v591
      %v624 = vsel %vm560, %v528, %v592
      %v625 = vsel %vm561, %v529, %v593
      %v626 = vsel %vm562, %v530, %v594
      %v627 = vsel %vm563, %v531, %v595
      %v628 = vsel %vm564, %v532, %v596
      %v629 = vsel %vm565, %v533, %v597
      %v630 = vsel %vm566, %v534, %v598
      %v631 = vsel %vm567, %v535, %v599
      %v632 = vsel %vm568, %v536, %v600
      %v633 = vsel %vm569, %v537, %v601
      %v634 = vsel %vm570, %v538, %v602
      %v635 = vsel %vm571, %v539, %v603
      %v636 = vsel %vm572, %v540, %v604
      %v637 = vsel %vm573, %v541, %v605
      %v638 = vsel %vm574, %v542, %v606
      %v639 = vsel %vm575, %v543, %v607
      %v640 = vsel %vm576, %v544, %v608
      %v641 = vsel %vm577, %v545, %v609
      %v642 = vsel %vm578, %v546, %v610
      %v643 = vsel %vm579, %v547, %v611
      %v644 = vsel %vm580, %v548, %v612
      %v645 = vsel %vm581, %v549, %v613
      %v646 = vsel %vm582, %v550, %v614
      %v647 = vsel %vm583, %v551, %v615
      %v648 = vsel %vm584, %v552, %v616
      %v649 = vsel %vm585, %v553, %v617
      %650 = vst [vmem:[%s199] sm:$0xff] %v618
      %651 = vst [vmem:[%s199 + $0x8] sm:$0xff] %v619
      %652 = vst [vmem:[%s199 + $0x10] sm:$0xff] %v620
      %653 = vst [vmem:[%s199 + $0x18] sm:$0xff] %v621
      %654 = vst [vmem:[%s199 + $0x20] sm:$0xff] %v622
      %655 = vst [vmem:[%s199 + $0x28] sm:$0xff] %v623
      %656 = vst [vmem:[%s199 + $0x30] sm:$0xff] %v624
      %657 = vst [vmem:[%s199 + $0x38] sm:$0xff] %v625
      %658 = vst [vmem:[%s199 + $0x40] sm:$0xff] %v626
      %659 = vst [vmem:[%s199 + $0x48] sm:$0xff] %v627
      %660 = vst [vmem:[%s199 + $0x50] sm:$0xff] %v628
      %661 = vst [vmem:[%s199 + $0x58] sm:$0xff] %v629
      %662 = vst [vmem:[%s199 + $0x60] sm:$0xff] %v630
      %663 = vst [vmem:[%s199 + $0x68] sm:$0xff] %v631
      %664 = vst [vmem:[%s199 + $0x70] sm:$0xff] %v632
      %665 = vst [vmem:[%s199 + $0x78] sm:$0xff] %v633
      %666 = vst [vmem:[%s199 + $0x80] sm:$0xff] %v634
      %667 = vst [vmem:[%s199 + $0x88] sm:$0xff] %v635
      %668 = vst [vmem:[%s199 + $0x90] sm:$0xff] %v636
      %669 = vst [vmem:[%s199 + $0x98] sm:$0xff] %v637
      %670 = vst [vmem:[%s199 + $0xa0] sm:$0xff] %v638
      %671 = vst [vmem:[%s199 + $0xa8] sm:$0xff] %v639
      %672 = vst [vmem:[%s199 + $0xb0] sm:$0xff] %v640
      %673 = vst [vmem:[%s199 + $0xb8] sm:$0xff] %v641
      %674 = vst [vmem:[%s199 + $0xc0] sm:$0xff] %v642
      %675 = vst [vmem:[%s199 + $0xc8] sm:$0xff] %v643
      %676 = vst [vmem:[%s199 + $0xd0] sm:$0xff] %v644
      %677 = vst [vmem:[%s199 + $0xd8] sm:$0xff] %v645
      %678 = vst [vmem:[%s199 + $0xe0] sm:$0xff] %v646
      %679 = vst [vmem:[%s199 + $0xe8] sm:$0xff] %v647
      %680 = vst [vmem:[%s199 + $0xf0] sm:$0xff] %v648
      %681 = vst [vmem:[%s199 + $0xf8] sm:$0xff] %v649
      %s682 = smul.u32 32, %s15
      %p683 = scmp.lt.s32.totalorder %s682, 63
      %s684 = scalar_select %p683, %s682, 63
      %s685 = smul.addr %s684, 8
      %s686 = scalar_lea.vmem %s4, %s685
      // Predicated region
      $region37: #{cnn_block_forward.3} parent=35 // pred_check
        %p687 = pneg %p122
      $region38: #{cnn_block_forward.3} parent=35 // pred_check_branch
        %689 = sbr.rel (%p687) target = $region40
      $region39: #{cnn_block_forward.3} parent=35 // pred_region
        %s690 = smul.u32 32, %s15
      $region40: #{cnn_block_forward.3} parent=35 // pred_fallthru
        _
    $region36: #{cnn_block_forward.3} parent=5 // pred_fallthru
      _
    %p691 = scmp.le.s32.totalorder 2, %s10
    // Predicated region
    $region41: #{cnn_block_forward.3} parent=5 // pred_check
      %p692 = pneg %p691
    $region42: #{cnn_block_forward.3} parent=5 // pred_check_branch
      %694 = sbr.rel (%p692) target = $region44
    $region43: #{cnn_block_forward.3} parent=5 // pred_region
      %s695 = ssub.s32 %s10, 2
      // Predicated region
      $region45: #{cnn_block_forward.3} parent=43 // pred_check
        %p696 = pneg %p128
      $region46: #{cnn_block_forward.3} parent=43 // pred_check_branch
        %698 = sbr.rel (%p696) target = $region48
      $region47: #{cnn_block_forward.3} parent=43 // pred_region
        %s699 = smul.u32 32, %s16
        %p700 = scmp.lt.s32.totalorder %s699, 63
        %s701 = scalar_select %p700, %s699, 63
        %s702 = smul.addr %s701, 8
        %s703 = scalar_lea.vmem %s4, %s702
      $region48: #{cnn_block_forward.3} parent=43 // pred_fallthru
        _
    $region44: #{cnn_block_forward.3} parent=5 // pred_fallthru
      _
  $region6: #{cnn_block_forward.3} parent=0 // loop_footer
    %s14 = sadd.s32 1, %s10
  $region7: #{cnn_block_forward.3} parent=0 // loop_footer_branch
    %9 = sbr.rel target = $region3
  $region8: #{cnn_block_forward.3} parent=0 // loop_exit
    _

</llo_original>
